<compile_context>
chip_gen: v5e
topology: v5e:2x2
jax: 0.10.0
libtpu: 0.0.40
codegen_flags: <defaults>
</compile_context>

<pallas_src>
import functools

import jax
import jax.numpy as jnp
from jax.experimental import pallas as pl
from jax.experimental.pallas import tpu as pltpu

HIDDEN = 128  # nn.Linear(embedding_dim, 128)


def _round_up(x, m):
    return (x + m - 1) // m * m


# ---------------------------------------------------------------------------
# Fused path: whole x resident in VMEM, one kernel, x read from HBM once.
# ---------------------------------------------------------------------------
def _fused_kernel(x_ref, w1_ref, b1_ref, w2_ref, b2_ref, out_ref):
    x = x_ref[...].astype(jnp.float32)                              # (N, S, D)
    x_avg = jnp.mean(x, axis=1)                                     # (N, D)

    # Linear(D, 128) + ReLU   (Dropout is identity at inference).
    h = jnp.dot(x_avg, w1_ref[...],
                preferred_element_type=jnp.float32) + b1_ref[...]   # (N, 128)
    h = jnp.maximum(h, 0.0)

    # Linear(128, 1) as a VPU reduction (no 1-lane-wide MXU pass).
    logits = jnp.sum(h * w2_ref[...], axis=-1, keepdims=True) + b2_ref[0, 0]  # (N, 1)

    # Exact softmax across the N axis (dim=0 in the PyTorch module).
    m = jnp.max(logits, axis=0, keepdims=True)
    e = jnp.exp(logits - m)
    w = e / jnp.sum(e, axis=0, keepdims=True)                       # (N, 1)

    out_ref[...] = jnp.sum(w[:, :, None] * x, axis=0,
                           keepdims=True).astype(out_ref.dtype)     # (1, S, D)


# ---------------------------------------------------------------------------
# Phase 1 (streamed path): attention weights over the N axis (softmax dim=0).
# ---------------------------------------------------------------------------
def _weights_kernel(S_total, t_s,
                    x_ref, w1_ref, b1_ref, w2_ref, b2_ref, w_out_ref, acc_ref):
    s = pl.program_id(0)

    @pl.when(s == 0)
    def _():
        acc_ref[...] = jnp.zeros_like(acc_ref)

    x = x_ref[...].astype(jnp.float32)                              # (N, t_s, D)
    if S_total % t_s != 0:
        # Remainder-safe: mask the out-of-range S rows of the last tile.
        idx = jax.lax.broadcasted_iota(jnp.int32, x.shape, 1)
        x = jnp.where(s * t_s + idx < S_total, x, 0.0)
    # Accumulate sum over the sequence axis; the mean's 1/S is folded into w1.
    acc_ref[...] += jnp.sum(x, axis=1)

    @pl.when(s == pl.num_programs(0) - 1)
    def _():
        h = jnp.dot(acc_ref[...], w1_ref[...],
                    preferred_element_type=jnp.float32) + b1_ref[...]   # (N, 128)
        h = jnp.maximum(h, 0.0)
        # Linear(128, 1) as a VPU reduction; b2 scalar lives in SMEM.
        logits = jnp.sum(h * w2_ref[...], axis=-1, keepdims=True) + b2_ref[0, 0]
        # Exact softmax over N (no approx reciprocal; weights sum to 1).
        m = jnp.max(logits, axis=0, keepdims=True)
        e = jnp.exp(logits - m)
        w_out_ref[...] = e / jnp.sum(e, axis=0, keepdims=True)      # (N, 1)


# ---------------------------------------------------------------------------
# Phase 2 (streamed path): lane-dense weighted sum over N on the (N, S*D) view.
# ---------------------------------------------------------------------------
def _weighted_sum_kernel(w_ref, x_ref, out_ref):
    x = x_ref[...].astype(jnp.float32)                              # (N, t_f)
    out_ref[...] = jnp.sum(w_ref[...] * x, axis=0, keepdims=True)   # (1, t_f)


# ---------------------------------------------------------------------------
# Wrapper
# ---------------------------------------------------------------------------
def attention_module(x, w1, b1, w2, b2, *, t_s=None, t_f=None, stream_dtype=None,
                     block_budget_bytes=4 * 1024 * 1024,
                     fused_vmem_budget=12 * 1024 * 1024):
    """Forward pass of AttentionModule.

    x : (N, S, D) float32
    w1: (D, 128), b1: (1, 128), w2: (128, 1), b2: (1, 1)   (y = x @ W + b layout)
    stream_dtype: optional (e.g. bf16) — x is cast ONCE here and the same array
                  feeds every kernel; all in-kernel accumulation stays float32.
    Returns (1, S, D) float32.
    """
    N, S, D = x.shape
    F = S * D
    f32 = jnp.float32

    b1_row = b1.reshape(1, HIDDEN).astype(f32)
    w2_row = w2.reshape(1, HIDDEN).astype(f32)    # row layout for VPU reduction
    b2_s = b2.reshape(1, 1).astype(f32)

    # Cast once; reused by every kernel (avoids a hidden HBM round-trip).
    x_stream = x if stream_dtype is None else x.astype(stream_dtype)
    itemsize = jnp.dtype(x_stream.dtype).itemsize

    # Padded (sublane=8, lane=128) footprints for VMEM accounting.
    D_pad = _round_up(D, 128)
    N_pad = _round_up(N, 8)
    S_pad = _round_up(S, 8)
    param_bytes = (_round_up(D, 8) * 128 + 2 * 8 * 128) * 4         # w1 + b1 + w2

    # ---- Fused fast path: x (plus f32 working copies) fits in VMEM ----
    x_blk_stream = N * S_pad * D_pad * itemsize
    x_blk_f32 = N * S_pad * D_pad * 4
    out_blk = S_pad * D_pad * 4
    fused_need = x_blk_stream + 2 * x_blk_f32 + out_blk + param_bytes + (1 << 20)
    if fused_need <= fused_vmem_budget:
        vmem_lim = int(min(max(fused_need, 8 << 20), 64 << 20))
        out = pl.pallas_call(
            _fused_kernel,
            out_shape=jax.ShapeDtypeStruct((1, S, D), f32),
            in_specs=[
                pl.BlockSpec(memory_space=pltpu.MemorySpace.VMEM),   # x (whole)
                pl.BlockSpec(memory_space=pltpu.MemorySpace.VMEM),   # w1
                pl.BlockSpec(memory_space=pltpu.MemorySpace.VMEM),   # b1
                pl.BlockSpec(memory_space=pltpu.MemorySpace.VMEM),   # w2
                pl.BlockSpec(memory_space=pltpu.MemorySpace.SMEM),   # b2 scalar
            ],
            out_specs=pl.BlockSpec(memory_space=pltpu.MemorySpace.VMEM),
            compiler_params=pltpu.CompilerParams(vmem_limit_bytes=vmem_lim),
        )(x_stream, w1.astype(f32), b1_row, w2_row, b2_s)
        return out

    # ---- Streamed two-phase path ----
    # Fold the 1/S of the mean into w1 so phase 1 only accumulates a sum.
    w1_scaled = (w1.astype(f32) * (1.0 / S))

    # Phase-1 tile over S; lane padding (D -> D_pad) included in the byte math.
    bytes_per_s_row = N * D_pad * itemsize
    if t_s is None:
        cap_s = max(8, (block_budget_bytes // max(bytes_per_s_row, 1)) // 8 * 8)
        t_s = S if S <= cap_s else cap_s
    elif t_s != S and t_s % 8 != 0:
        raise ValueError("t_s must be a multiple of 8 or equal to S")

    # Phase-2 tile over the flattened S*D axis (lane-dense output).
    bytes_per_lane = N_pad * itemsize
    if t_f is None:
        cap_f = max(128, (block_budget_bytes // max(bytes_per_lane, 1)) // 128 * 128)
        t_f = F if F <= cap_f else cap_f
    elif t_f != F and t_f % 128 != 0:
        raise ValueError("t_f must be a multiple of 128 or equal to S*D")

    # Explicit VMEM limits from the *padded* double-buffered block sizes.
    x_blk1 = N * _round_up(t_s, 8) * D_pad * itemsize
    acc_bytes = N_pad * D_pad * 4
    out1_bytes = N_pad * 128 * 4
    limit1 = int(min(max(2 * x_blk1 + 2 * (param_bytes + out1_bytes) + acc_bytes
                         + (2 << 20), 8 << 20), 64 << 20))

    x_blk2 = N_pad * _round_up(t_f, 128) * itemsize
    w_bytes = N_pad * 128 * 4
    out2_bytes = 8 * _round_up(t_f, 128) * 4
    limit2 = int(min(max(2 * (x_blk2 + w_bytes + out2_bytes) + (2 << 20), 8 << 20),
                     64 << 20))

    # ---- Phase 1: attention weights (N, 1) ----
    weights = pl.pallas_call(
        functools.partial(_weights_kernel, S, t_s),
        out_shape=jax.ShapeDtypeStruct((N, 1), f32),
        grid=(pl.cdiv(S, t_s),),
        in_specs=[
            pl.BlockSpec((N, t_s, D), lambda s: (0, s, 0)),
            pl.BlockSpec((D, HIDDEN), lambda s: (0, 0)),
            pl.BlockSpec((1, HIDDEN), lambda s: (0, 0)),
            pl.BlockSpec((1, HIDDEN), lambda s: (0, 0)),
            pl.BlockSpec(memory_space=pltpu.MemorySpace.SMEM),       # b2 scalar
        ],
        out_specs=pl.BlockSpec((N, 1), lambda s: (0, 0)),
        scratch_shapes=[pltpu.VMEM((N, D), f32)],
        compiler_params=pltpu.CompilerParams(
            dimension_semantics=("arbitrary",),                      # S reduction
            vmem_limit_bytes=limit1),
    )(x_stream, w1_scaled, b1_row, w2_row, b2_s)

    # ---- Phase 2: lane-dense weighted sum -> (1, S*D) ----
    x_flat = x_stream.reshape(N, F)                                  # contiguous view
    out_flat = pl.pallas_call(
        _weighted_sum_kernel,
        out_shape=jax.ShapeDtypeStruct((1, F), f32),
        grid=(pl.cdiv(F, t_f),),
        in_specs=[
            pl.BlockSpec((N, 1), lambda i: (0, 0)),                  # weights (resident)
            pl.BlockSpec((N, t_f), lambda i: (0, i)),                # streamed x slab
        ],
        out_specs=pl.BlockSpec((1, t_f), lambda i: (0, i)),          # lane-dense store
        compiler_params=pltpu.CompilerParams(
            dimension_semantics=("parallel",),                       # TC sharding
            vmem_limit_bytes=limit2),
    )(weights, x_flat)

    return out_flat.reshape(1, S, D)


def reference(x, w1, b1, w2, b2):
    x_avg = jnp.mean(x, axis=1)
    h = jnp.maximum(x_avg @ w1 + b1, 0.0)
    logits = h @ w2 + b2
    w = jax.nn.softmax(logits, axis=0)
    return jnp.sum(w[:, :, None] * x, axis=0, keepdims=True)


if __name__ == "__main__":
    key = jax.random.PRNGKey(0)
    kx, k1, k2, k3, k4, kx2 = jax.random.split(key, 6)

    N, S, D = 8, 16, 32   # (num_items, seq_len, embedding_dim)
    x = jax.random.normal(kx, (N, S, D), dtype=jnp.float32)

    # Deterministic synthetic parameters (stored pre-transposed: y = x @ W + b).
    w1 = jax.random.normal(k1, (D, HIDDEN), dtype=jnp.float32) * 0.1
    b1 = jax.random.normal(k2, (1, HIDDEN), dtype=jnp.float32) * 0.1
    w2 = jax.random.normal(k3, (HIDDEN, 1), dtype=jnp.float32) * 0.1
    b2 = jax.random.normal(k4, (1, 1), dtype=jnp.float32) * 0.1

    # 1) Fused single-kernel fast path (taken automatically at this scale).
    out = attention_module(x, w1, b1, w2, b2)
    out = jax.block_until_ready(out)
    ref = reference(x, w1, b1, w2, b2)
    assert out.shape == (1, S, D)
    assert jnp.allclose(out, ref, atol=1e-4, rtol=1e-4), \
        float(jnp.max(jnp.abs(out - ref)))

    # 2) Streamed two-phase path with a ragged S tail (S=20 not divisible by
    #    t_s=8) to exercise multi-step grids and the in-kernel tail masking.
    S2 = 20
    x2 = jax.random.normal(kx2, (N, S2, D), dtype=jnp.float32)
    out2 = attention_module(x2, w1, b1, w2, b2, t_s=8, t_f=128,
                            fused_vmem_budget=0)       # force streamed path
    out2 = jax.block_until_ready(out2)
    ref2 = reference(x2, w1, b1, w2, b2)
    assert out2.shape == (1, S2, D)
    assert jnp.allclose(out2, ref2, atol=1e-4, rtol=1e-4), \
        float(jnp.max(jnp.abs(out2 - ref2)))

    print("KERNEL_OK")
</pallas_src>

<mosaic_0001>
module attributes {stable_mosaic.version = 11 : i64} {
  func.func @_fused_kernel(%arg0: memref<8x16x32xf32, #tpu.memory_space<vmem>>, %arg1: memref<32x128xf32, #tpu.memory_space<vmem>>, %arg2: memref<1x128xf32, #tpu.memory_space<vmem>>, %arg3: memref<1x128xf32, #tpu.memory_space<vmem>>, %arg4: memref<1x1xf32, #tpu.memory_space<smem>>, %arg5: memref<1x16x32xf32, #tpu.memory_space<vmem>>) attributes {dimension_semantics = [], scalar_prefetch = 0 : i64, scratch_operands = 0 : i64, tpu.core_type = #tpu.core_type<tc>} {
    %c0 = arith.constant 0 : index
    %c0_0 = arith.constant 0 : index
    %c0_1 = arith.constant 0 : index
    %0 = vector.load %arg0[%c0, %c0_0, %c0_1] : memref<8x16x32xf32, #tpu.memory_space<vmem>>, vector<8x16x32xf32>
    %cst = arith.constant dense<0.000000e+00> : vector<8x32xf32>
    %1 = vector.multi_reduction <add>, %0, %cst [1] : vector<8x16x32xf32> to vector<8x32xf32>
    %cst_2 = arith.constant 1.600000e+01 : f32
    %2 = vector.broadcast %cst_2 : f32 to vector<8x32xf32>
    %3 = arith.divf %1, %2 : vector<8x32xf32>
    %c0_3 = arith.constant 0 : index
    %c0_4 = arith.constant 0 : index
    %4 = vector.load %arg1[%c0_3, %c0_4] : memref<32x128xf32, #tpu.memory_space<vmem>>, vector<32x128xf32>
    %cst_5 = arith.constant dense<0.000000e+00> : vector<8x128xf32>
    %5 = tpu.matmul %3, %4, %cst_5 {dimension_numbers = #tpu.dot_dimension_numbers<[1], [0], [0], [1], [0, 0, 1, 1], [], []>} : vector<8x32xf32>, vector<32x128xf32>, vector<8x128xf32> -> vector<8x128xf32>
    %c0_6 = arith.constant 0 : index
    %c0_7 = arith.constant 0 : index
    %6 = vector.load %arg2[%c0_6, %c0_7] : memref<1x128xf32, #tpu.memory_space<vmem>>, vector<1x128xf32>
    %7 = vector.broadcast %6 : vector<1x128xf32> to vector<8x128xf32>
    %8 = arith.addf %5, %7 : vector<8x128xf32>
    %cst_8 = arith.constant 0.000000e+00 : f32
    %9 = vector.broadcast %cst_8 : f32 to vector<8x128xf32>
    %10 = arith.maximumf %8, %9 : vector<8x128xf32>
    %c0_9 = arith.constant 0 : index
    %c0_10 = arith.constant 0 : index
    %11 = vector.load %arg3[%c0_9, %c0_10] : memref<1x128xf32, #tpu.memory_space<vmem>>, vector<1x128xf32>
    %12 = vector.broadcast %11 : vector<1x128xf32> to vector<8x128xf32>
    %13 = arith.mulf %10, %12 : vector<8x128xf32>
    %cst_11 = arith.constant dense<0.000000e+00> : vector<8xf32>
    %14 = vector.multi_reduction <add>, %13, %cst_11 [1] : vector<8x128xf32> to vector<8xf32>
    %15 = vector.shape_cast %14 : vector<8xf32> to vector<8x1xf32>
    %c0_12 = arith.constant 0 : index
    %c0_13 = arith.constant 0 : index
    %16 = memref.load %arg4[%c0_12, %c0_13] : memref<1x1xf32, #tpu.memory_space<smem>>
    %17 = vector.broadcast %16 : f32 to vector<8x1xf32>
    %18 = arith.addf %15, %17 : vector<8x1xf32>
    %cst_14 = arith.constant dense<0xFF800000> : vector<1xf32>
    %19 = vector.multi_reduction <maximumf>, %18, %cst_14 [0] : vector<8x1xf32> to vector<1xf32>
    %20 = vector.shape_cast %19 : vector<1xf32> to vector<1x1xf32>
    %21 = vector.broadcast %20 : vector<1x1xf32> to vector<8x1xf32>
    %22 = arith.subf %18, %21 : vector<8x1xf32>
    %23 = math.exp %22 : vector<8x1xf32>
    %cst_15 = arith.constant dense<0.000000e+00> : vector<1xf32>
    %24 = vector.multi_reduction <add>, %23, %cst_15 [0] : vector<8x1xf32> to vector<1xf32>
    %25 = vector.shape_cast %24 : vector<1xf32> to vector<1x1xf32>
    %26 = vector.broadcast %25 : vector<1x1xf32> to vector<8x1xf32>
    %27 = arith.divf %23, %26 : vector<8x1xf32>
    %28 = vector.shape_cast %27 : vector<8x1xf32> to vector<8x1x1xf32>
    %29 = vector.broadcast %28 : vector<8x1x1xf32> to vector<8x16x32xf32>
    %30 = arith.mulf %29, %0 : vector<8x16x32xf32>
    %cst_16 = arith.constant dense<0.000000e+00> : vector<16x32xf32>
    %31 = vector.multi_reduction <add>, %30, %cst_16 [0] : vector<8x16x32xf32> to vector<16x32xf32>
    %32 = vector.shape_cast %31 : vector<16x32xf32> to vector<1x16x32xf32>
    %c0_17 = arith.constant 0 : index
    %c0_18 = arith.constant 0 : index
    %c0_19 = arith.constant 0 : index
    %33 = vector.load %arg5[%c0_17, %c0_18, %c0_19] : memref<1x16x32xf32, #tpu.memory_space<vmem>>, vector<1x16x32xf32>
    tpu.vector_store %arg5[%c0_17, %c0_18, %c0_19], %32 {strides = array<i32>} : memref<1x16x32xf32, #tpu.memory_space<vmem>>, vector<1x16x32xf32>,
    return
  }
}

</mosaic_0001>

<llo_original>
// kernel: tpu_custom_call.1
$region0: #{tpu_custom_call.1}
  #allocation0 [shape = 'u32[]', space=smem, size = 0x4, offset = 0x4, fixed_abs, tag = 'smem constant byte address 0x4 - core index']
  #allocation1 [shape = 'u32[72,128]{1,0:T(1,128)}', space=vmem, size = 0x9000, scoped, tag = 'internal scratch']
  #allocation2 [shape = 'f32[1,1]{1,0:T(1,128)S(6)}', space=smem, size = 0x200, scoped, tag = 'scoped memory for tpu_custom_call.1']
  %s0 = inlined_call_operand.hbm [shape: f32[8,16,32], index: 0, kind: input, shape index: {}]
  %s1 = inlined_call_operand.hbm [shape: f32[32,128], index: 1, kind: input, shape index: {}]
  %s2 = inlined_call_operand.vmem [shape: f32[1,128], index: 2, kind: input, shape index: {}]
  %s3 = inlined_call_operand.vmem [shape: f32[1,128], index: 3, kind: input, shape index: {}]
  %s4 = inlined_call_operand.<no memory space> [shape: f32[1,1], index: 4, kind: input, shape index: {}]
  %s5 = inlined_call_operand.hbm [shape: f32[1,16,32], index: 5, kind: output, shape index: {}]
  %s6 = sld [smem:[#allocation0]]
  $region38: #{tpu_custom_call.1} parent=0
    _
  %s8 = ssub.s32 1, %s6
  %s9 = scalar_select 0, %s8, %s6
  %10 = sst [smem:[#allocation2]] %s4
  $region1: #{tpu_custom_call.1} parent=0
    #allocation3 [shape = 'u8[65536]{0}', space=vmem, size = 0x10000, scoped, tag = 'input window, operand 0, single buffered']
    #allocation4 [shape = 's32[1]{0}', space=sflag, size = 0x4, scoped, tag = 'scoped memory for tpu_custom_call.1']
    #allocation5 [shape = 's32[1]{0}', space=sflag, size = 0x4, scoped, tag = 'scoped memory for tpu_custom_call.1']
    #allocation6 [shape = 'u8[16384]{0}', space=vmem, size = 0x4000, scoped, tag = 'input window, operand 1, single buffered']
    #allocation7 [shape = 's32[1]{0}', space=sflag, size = 0x4, scoped, tag = 'scoped memory for tpu_custom_call.1']
    #allocation8 [shape = 'u8[8192]{0}', space=vmem, size = 0x2000, scoped, tag = 'output window, operand 0, single buffered']
    %11 = vsyncpa [#allocation4], 0
    %12 = vsyncpa [#allocation7], 0
    %13 = vsyncpa [#allocation5], 0
    // Predicated region
    $region2: #{tpu_custom_call.1} parent=1 // pred_check
      _
    $region3: #{tpu_custom_call.1} parent=1 // pred_check_branch
      %15 = sbr.rel (0) target = $region5
    $region4: #{tpu_custom_call.1} parent=1 // pred_region
      %17 = vsyncadd [#allocation4], 0
      %s18 = sshll.u32 %s0, 4
      %s19 = int_to_ptr.hbm [resolvable:$true] %s18
      %s20 = sshll.u32 [#allocation3], 4
      %s21 = int_to_ptr.vmem [resolvable:$true] %s20
      %26 = dma.hbm_to_vmem [thread:$0]  %s19, 2048, %s21, [#allocation4], 128, 128, 8
    $region5: #{tpu_custom_call.1} parent=1 // pred_fallthru
      _
    // Predicated region
    $region6: #{tpu_custom_call.1} parent=1 // pred_check
      _
    $region7: #{tpu_custom_call.1} parent=1 // pred_check_branch
      %28 = sbr.rel (0) target = $region9
    $region8: #{tpu_custom_call.1} parent=1 // pred_region
      %30 = vsyncadd [#allocation7], 0
      %s31 = sshll.u32 %s1, 4
      %s32 = int_to_ptr.hbm [resolvable:$true] %s31
      %s33 = sshll.u32 [#allocation6], 4
      %s34 = int_to_ptr.vmem [resolvable:$true] %s33
      %39 = dma.hbm_to_vmem [thread:$0]  %s32, 512, %s34, [#allocation7], 128, 128, 8
    $region9: #{tpu_custom_call.1} parent=1 // pred_fallthru
      _
    // Predicated region
    $region10: #{tpu_custom_call.1} parent=1 // pred_check
      _
    $region11: #{tpu_custom_call.1} parent=1 // pred_check_branch
      %41 = sbr.rel (0) target = $region13
    $region12: #{tpu_custom_call.1} parent=1 // pred_region
      _
    $region13: #{tpu_custom_call.1} parent=1 // pred_fallthru
      _
    // Predicated region
    $region14: #{tpu_custom_call.1} parent=1 // pred_check
      _
    $region15: #{tpu_custom_call.1} parent=1 // pred_check_branch
      %43 = sbr.rel (0) target = $region17
    $region16: #{tpu_custom_call.1} parent=1 // pred_region
      _
    $region17: #{tpu_custom_call.1} parent=1 // pred_fallthru
      _
    // Predicated region
    $region18: #{tpu_custom_call.1} parent=1 // pred_check
      _
    $region19: #{tpu_custom_call.1} parent=1 // pred_check_branch
      %45 = sbr.rel (0) target = $region21
    $region20: #{tpu_custom_call.1} parent=1 // pred_region
      _
    $region21: #{tpu_custom_call.1} parent=1 // pred_fallthru
      _
    // Predicated region
    $region22: #{tpu_custom_call.1} parent=1 // pred_check
      _
    $region23: #{tpu_custom_call.1} parent=1 // pred_check_branch
      %47 = sbr.rel (0) target = $region25
    $region24: #{tpu_custom_call.1} parent=1 // pred_region
      %49 = dma.done [#allocation4], 2048
    $region25: #{tpu_custom_call.1} parent=1 // pred_fallthru
      _
    // Predicated region
    $region26: #{tpu_custom_call.1} parent=1 // pred_check
      _
    $region27: #{tpu_custom_call.1} parent=1 // pred_check_branch
      %51 = sbr.rel (0) target = $region29
    $region28: #{tpu_custom_call.1} parent=1 // pred_region
      %53 = dma.done [#allocation7], 512
    $region29: #{tpu_custom_call.1} parent=1 // pred_fallthru
      _
    %v54 = vld [vmem:[#allocation3] sm:$0xff]
    %v55 = vld [vmem:[#allocation3 + $0x8] sm:$0xff]
    %v56 = vld [vmem:[#allocation3 + $0x10] sm:$0xff]
    %v57 = vld [vmem:[#allocation3 + $0x18] sm:$0xff]
    %v58 = vld [vmem:[#allocation3 + $0x20] sm:$0xff]
    %v59 = vld [vmem:[#allocation3 + $0x28] sm:$0xff]
    %v60 = vld [vmem:[#allocation3 + $0x30] sm:$0xff]
    %v61 = vld [vmem:[#allocation3 + $0x38] sm:$0xff]
    %v62 = vld [vmem:[#allocation3 + $0x40] sm:$0xff]
    %v63 = vld [vmem:[#allocation3 + $0x48] sm:$0xff]
    %v64 = vld [vmem:[#allocation3 + $0x50] sm:$0xff]
    %v65 = vld [vmem:[#allocation3 + $0x58] sm:$0xff]
    %v66 = vld [vmem:[#allocation3 + $0x60] sm:$0xff]
    %v67 = vld [vmem:[#allocation3 + $0x68] sm:$0xff]
    %v68 = vld [vmem:[#allocation3 + $0x70] sm:$0xff]
    %v69 = vld [vmem:[#allocation3 + $0x78] sm:$0xff]
    %vm70 = vcmask 261120
    %v71 = vsel %vm70, %v54, 0.0
    %v72 = vsel %vm70, %v55, 0.0
    %v73 = vadd.f32 %v71, %v72
    %v74 = vrot.slane %v73, 4
    %v75 = vadd.f32 %v73, %v74
    %v76 = vrot.slane %v75, 2
    %v77 = vadd.f32 %v75, %v76
    %v78 = vrot.slane %v77, 1
    %v79 = vadd.f32 %v77, %v78
    %v80 = vsel %vm70, %v56, 0.0
    %v81 = vsel %vm70, %v57, 0.0
    %v82 = vadd.f32 %v80, %v81
    %v83 = vrot.slane %v82, 4
    %v84 = vadd.f32 %v82, %v83
    %v85 = vrot.slane %v84, 2
    %v86 = vadd.f32 %v84, %v85
    %v87 = vrot.slane %v86, 1
    %v88 = vadd.f32 %v86, %v87
    %v89 = vsel %vm70, %v58, 0.0
    %v90 = vsel %vm70, %v59, 0.0
    %v91 = vadd.f32 %v89, %v90
    %v92 = vrot.slane %v91, 4
    %v93 = vadd.f32 %v91, %v92
    %v94 = vrot.slane %v93, 2
    %v95 = vadd.f32 %v93, %v94
    %v96 = vrot.slane %v95, 1
    %v97 = vadd.f32 %v95, %v96
    %v98 = vsel %vm70, %v60, 0.0
    %v99 = vsel %vm70, %v61, 0.0
    %v100 = vadd.f32 %v98, %v99
    %v101 = vrot.slane %v100, 4
    %v102 = vadd.f32 %v100, %v101
    %v103 = vrot.slane %v102, 2
    %v104 = vadd.f32 %v102, %v103
    %v105 = vrot.slane %v104, 1
    %v106 = vadd.f32 %v104, %v105
    %v107 = vsel %vm70, %v62, 0.0
    %v108 = vsel %vm70, %v63, 0.0
    %v109 = vadd.f32 %v107, %v108
    %v110 = vrot.slane %v109, 4
    %v111 = vadd.f32 %v109, %v110
    %v112 = vrot.slane %v111, 2
    %v113 = vadd.f32 %v111, %v112
    %v114 = vrot.slane %v113, 1
    %v115 = vadd.f32 %v113, %v114
    %v116 = vsel %vm70, %v64, 0.0
    %v117 = vsel %vm70, %v65, 0.0
    %v118 = vadd.f32 %v116, %v117
    %v119 = vrot.slane %v118, 4
    %v120 = vadd.f32 %v118, %v119
    %v121 = vrot.slane %v120, 2
    %v122 = vadd.f32 %v120, %v121
    %v123 = vrot.slane %v122, 1
    %v124 = vadd.f32 %v122, %v123
    %v125 = vsel %vm70, %v66, 0.0
    %v126 = vsel %vm70, %v67, 0.0
    %v127 = vadd.f32 %v125, %v126
    %v128 = vrot.slane %v127, 4
    %v129 = vadd.f32 %v127, %v128
    %v130 = vrot.slane %v129, 2
    %v131 = vadd.f32 %v129, %v130
    %v132 = vrot.slane %v131, 1
    %v133 = vadd.f32 %v131, %v132
    %v134 = vsel %vm70, %v68, 0.0
    %v135 = vsel %vm70, %v69, 0.0
    %v136 = vadd.f32 %v134, %v135
    %v137 = vrot.slane %v136, 4
    %v138 = vadd.f32 %v136, %v137
    %v139 = vrot.slane %v138, 2
    %v140 = vadd.f32 %v138, %v139
    %v141 = vrot.slane %v140, 1
    %v142 = vadd.f32 %v140, %v141
    %v143 = vrcp.pop 16.0
    %v144 = vmul.f32 16.0, %v143
    %v145 = vsub.f32 1.0, %v144
    %v146 = vmul.f32 %v143, %v145
    %v147 = vadd.f32 %v143, %v146
    %vm148 = vweird.f32 %v143
    %v149 = vsel %vm148, %v143, %v147
    %v150 = vmul.f32 %v79, %v149
    %v151 = vmul.f32 %v88, %v149
    %v152 = vmul.f32 %v97, %v149
    %v153 = vmul.f32 %v106, %v149
    %v154 = vmul.f32 %v115, %v149
    %v155 = vmul.f32 %v124, %v149
    %v156 = vmul.f32 %v133, %v149
    %v157 = vmul.f32 %v142, %v149
    %v158 = vld [vmem:[#allocation6] sm:$0xff]
    %v159 = vld [vmem:[#allocation6 + $0x8] sm:$0xff]
    %v160 = vld [vmem:[#allocation6 + $0x10] sm:$0xff]
    %v161 = vld [vmem:[#allocation6 + $0x18] sm:$0xff]
    %v162 = vld [vmem:[%s2] sm:$0x1]
    %v164 = vperm.slane %v162, 0
    %vm174 = vcmask 1041409
    %v175 = vsel %vm174, %v151, %v150
    %vm176 = vcmask 1042434
    %v177 = vsel %vm176, %v152, %v175
    %vm178 = vcmask 1043459
    %v179 = vsel %vm178, %v153, %v177
    %vm180 = vcmask 1044484
    %v181 = vsel %vm180, %v154, %v179
    %vm182 = vcmask 1045509
    %v183 = vsel %vm182, %v155, %v181
    %vm184 = vcmask 1046534
    %v185 = vsel %vm184, %v156, %v183
    %vm186 = vcmask 1047559
    %v187 = vsel %vm186, %v157, %v185
    %v188 = vsel %vm70, %v187, 0
    %190 = vmatpush.msra.mxu0 0.0
    %191 = vmatpush.msra.mxu0 0.0
    %192 = vmatpush.msra.mxu0 0.0
    %193 = vmatpush.msra.mxu0 0.0
    %194 = vmatpush.msra.mxu0 0.0
    %195 = vmatpush.msra.mxu0 0.0
    %196 = vmatpush.msra.mxu0 0.0
    %197 = vmatpush.msra.mxu0 0.0
    %198 = vmatpush.msra.mxu0 0.0
    %199 = vmatpush.msra.mxu0 0.0
    %200 = vmatpush.msra.mxu0 0.0
    %201 = vmatpush.msra.mxu0 0.0
    %202 = vmatpush.msra.mxu0 %v161
    %203 = vmatpush.msra.mxu0 %v160
    %204 = vmatpush.msra.mxu0 %v159
    %205 = vmatpush.msra.mxu0 %v158
    %206 = vmatmul.f32.gmra.mxu0 %v188
    %v207 = vpop.f32.mrf.mxu0
    %v208 = vadd.f32 %v164, %v207
    %209 = vdwg.mxu0
    %v210 = vmax.f32 %v208, 0.0
    %v211 = vld [vmem:[%s3] sm:$0x1]
    %v213 = vperm.slane %v211, 0
    %v215 = vmul.f32 %v210, %v213
    %216 = vadd.xlane.f32.xlu0 %v215
    %v217 = vpop.xlane.xlu0 %216
    %s218 = sld [smem:[#allocation2]]
    %v219 = vstv %s218
    %v220 = vadd.f32 %v217, %v219
    %v221 = vrot.slane %v220, 4
    %v222 = vmax.f32 %v220, %v221
    %v223 = vrot.slane %v222, 2
    %v224 = vmax.f32 %v222, %v223
    %v225 = vrot.slane %v224, 1
    %v226 = vmax.f32 %v224, %v225
    %v227 = vsub.f32 %v220, %v226
    %v228 = vmul.f32 %v227, 1.442695
    %v229 = vpow.pop %v228
    %v230 = vrot.slane %v229, 4
    %v231 = vadd.f32 %v229, %v230
    %v232 = vrot.slane %v231, 2
    %v233 = vadd.f32 %v231, %v232
    %v234 = vrot.slane %v233, 1
    %v235 = vadd.f32 %v233, %v234
    %v236 = vrcp.pop %v235
    %v237 = vmul.f32 %v235, %v236
    %v238 = vsub.f32 1.0, %v237
    %v239 = vmul.f32 %v236, %v238
    %v240 = vadd.f32 %v236, %v239
    %vm241 = vweird.f32 %v235
    %vm242 = vweird.f32 %v236
    %vm243 = vmor %vm241, %vm242
    %v244 = vsel %vm243, %v236, %v240
    %v245 = vand.u32 2147483647, %v235
    %vm246 = vcmp.eq.f32.partialorder %v245, 8.507059e+37
    %v247 = vand.u32 %v235, 2147483648
    %v248 = vor.u32 1.1754944e-38, %v247
    %v249 = vsel %vm246, %v248, %v244
    %v250 = vmul.f32 %v229, %v249
    %v252 = vperm.slane %v250, 0
    %v253 = vperm.slane %v250, 1
    %v254 = vperm.slane %v250, 2
    %v255 = vperm.slane %v250, 3
    %v256 = vperm.slane %v250, 4
    %v257 = vperm.slane %v250, 5
    %v258 = vperm.slane %v250, 6
    %v259 = vperm.slane %v250, 7
    %v268 = vmul.f32 %v252, %v54
    %v269 = vmul.f32 %v252, %v55
    %v270 = vmul.f32 %v253, %v56
    %v271 = vmul.f32 %v253, %v57
    %v272 = vmul.f32 %v254, %v58
    %v273 = vmul.f32 %v254, %v59
    %v274 = vmul.f32 %v255, %v60
    %v275 = vmul.f32 %v255, %v61
    %v276 = vmul.f32 %v256, %v62
    %v277 = vmul.f32 %v256, %v63
    %v278 = vmul.f32 %v257, %v64
    %v279 = vmul.f32 %v257, %v65
    %v280 = vmul.f32 %v258, %v66
    %v281 = vmul.f32 %v258, %v67
    %v282 = vmul.f32 %v259, %v68
    %v283 = vmul.f32 %v259, %v69
    %v284 = vsel %vm70, %v268, 0.0
    %v285 = vsel %vm70, %v270, 0.0
    %v286 = vadd.f32 %v284, %v285
    %v287 = vsel %vm70, %v272, 0.0
    %v288 = vadd.f32 %v286, %v287
    %v289 = vsel %vm70, %v274, 0.0
    %v290 = vadd.f32 %v288, %v289
    %v291 = vsel %vm70, %v276, 0.0
    %v292 = vadd.f32 %v290, %v291
    %v293 = vsel %vm70, %v278, 0.0
    %v294 = vadd.f32 %v292, %v293
    %v295 = vsel %vm70, %v280, 0.0
    %v296 = vadd.f32 %v294, %v295
    %v297 = vsel %vm70, %v282, 0.0
    %v298 = vadd.f32 %v296, %v297
    %v299 = vsel %vm70, %v269, 0.0
    %v300 = vsel %vm70, %v271, 0.0
    %v301 = vadd.f32 %v299, %v300
    %v302 = vsel %vm70, %v273, 0.0
    %v303 = vadd.f32 %v301, %v302
    %v304 = vsel %vm70, %v275, 0.0
    %v305 = vadd.f32 %v303, %v304
    %v306 = vsel %vm70, %v277, 0.0
    %v307 = vadd.f32 %v305, %v306
    %v308 = vsel %vm70, %v279, 0.0
    %v309 = vadd.f32 %v307, %v308
    %v310 = vsel %vm70, %v281, 0.0
    %v311 = vadd.f32 %v309, %v310
    %v312 = vsel %vm70, %v283, 0.0
    %v313 = vadd.f32 %v311, %v312
    %314 = vst.msk [vmem:[#allocation8] sm:$0xff] %vm70, %v298
    %315 = vst.msk [vmem:[#allocation8 + $0x8] sm:$0xff] %vm70, %v313
    // Predicated region
    $region30: #{tpu_custom_call.1} parent=1 // pred_check
      _
    $region31: #{tpu_custom_call.1} parent=1 // pred_check_branch
      %317 = sbr.rel (0) target = $region33
    $region32: #{tpu_custom_call.1} parent=1 // pred_region
      %319 = vsyncadd [#allocation5], 0
      %s320 = sshll.u32 [#allocation8], 4
      %s321 = int_to_ptr.vmem [resolvable:$true] %s320
      %s322 = sshll.u32 %s5, 4
      %s323 = int_to_ptr.hbm [resolvable:$true] %s322
      %328 = dma.vmem_to_hbm [thread:$0]  %s321, 256, %s323, [#allocation5], 128, 128, 8
    $region33: #{tpu_custom_call.1} parent=1 // pred_fallthru
      _
    // Predicated region
    $region34: #{tpu_custom_call.1} parent=1 // pred_check
      _
    $region35: #{tpu_custom_call.1} parent=1 // pred_check_branch
      %330 = sbr.rel (0) target = $region37
    $region36: #{tpu_custom_call.1} parent=1 // pred_region
      %332 = dma.done [#allocation5], 256
    $region37: #{tpu_custom_call.1} parent=1 // pred_fallthru
      _
    %333 = vsyncpa [#allocation4], 1
    %334 = vsyncpa [#allocation7], 1
    %335 = vsyncpa [#allocation5], 1

</llo_original>
